<compile_context>
chip_gen: v7x
topology: tpu7x:2x2x1
jax: 0.10.0
libtpu: 0.0.40
codegen_flags: <defaults>
</compile_context>

<pallas_src>
import math
import functools

import jax
import jax.numpy as jnp
from jax import lax
from jax.experimental import pallas as pl
from jax.experimental.pallas import tpu as pltpu


def _ceil_div(a, b):
    return -(-a // b)


def _round_up(a, b):
    return _ceil_div(a, b) * b


# ----------------------------------------------------------------------------
# Parameter construction (plain-JAX glue — mirrors nn.Module.__init__)
# ----------------------------------------------------------------------------
def build_window(kernel_size, window_fn="hann"):
    n = jnp.arange(kernel_size, dtype=jnp.float32)
    if window_fn == "hann":
        # torch.hann_window(kernel_size, periodic=True)
        return 0.5 - 0.5 * jnp.cos(2.0 * math.pi * n / kernel_size)
    elif window_fn in (None, "rect", "rectangular"):
        return jnp.ones((kernel_size,), jnp.float32)
    else:
        raise ValueError(f"unsupported window_fn={window_fn}")


def make_fourier_basis(n_basis, kernel_size, window_fn="hann",
                       trainable_phase=False, onesided=True):
    """Returns (basis_real, basis_imag), each of shape (n_bins, kernel_size)."""
    n_half = n_basis // 2 + 1
    omega = 2.0 * math.pi * jnp.arange(n_half, dtype=jnp.float32) / n_basis
    n = jnp.arange(kernel_size, dtype=jnp.float32)
    window = build_window(kernel_size, window_fn)

    omega_n = omega[:, None] * n[None, :]                      # (n_half, K)
    if trainable_phase:
        phi = jnp.zeros((n_half,), jnp.float32)                # deterministic init
        arg = -(omega_n + phi[:, None])
    else:
        arg = -omega_n
    basis_real = jnp.cos(arg)
    basis_imag = jnp.sin(arg)

    if not onesided:
        # mirror interior bins (conjugate symmetry) — matches torch.split/flip
        real_conj = jnp.flip(basis_real[1:n_basis // 2], axis=0)
        imag_conj = jnp.flip(basis_imag[1:n_basis // 2], axis=0)
        basis_real = jnp.concatenate([basis_real, real_conj], axis=0)
        basis_imag = jnp.concatenate([basis_imag, -imag_conj], axis=0)

    basis_real = window[None, :] * basis_real
    basis_imag = window[None, :] * basis_imag
    return basis_real.astype(jnp.float32), basis_imag.astype(jnp.float32)


# ----------------------------------------------------------------------------
# Pallas kernel: stride-decomposed strided conv (== conv1d(input, basis, stride))
# ----------------------------------------------------------------------------
def _fourier_stft_kernel(x_ref, basis_ref, out_ref, *, frame_tile, n_taps):
    """
    x_ref:     (1, n_rows_p, stride)      signal reshaped into stride-wide rows
    basis_ref: (R, NB_p, stride)          fused windowed cos/sin basis taps
    out_ref:   (1, NB_p, frame_tile)      real bins stacked over imag bins
    out[o, f] = sum_r sum_s basis[r, o, s] * x[f + r, s]
    """
    j = pl.program_id(1)
    base = pl.multiple_of(j * frame_tile, frame_tile)

    def tap(r):
        xs = x_ref[0, pl.ds(base + r, frame_tile), :]          # (TF, stride)
        # (NB_p, stride) · (TF, stride)^T -> (NB_p, TF); contraction on lane dim
        return lax.dot_general(
            basis_ref[r], xs,
            dimension_numbers=(((1,), (1,)), ((), ())),
            preferred_element_type=jnp.float32)

    acc = tap(0)
    for r in range(1, n_taps):                                 # small static unroll
        acc = acc + tap(r)
    out_ref[0, :, :] = acc


def fourier_encoder_forward(x, *, n_basis, kernel_size, stride,
                            window_fn="hann", trainable_phase=False,
                            onesided=True, return_complex=True,
                            frame_tile=256, compute_dtype=jnp.bfloat16):
    """x: (batch, 1, T) float32.  Matches FourierEncoder.forward semantics."""
    assert x.ndim == 3 and x.shape[1] == 1
    B, _, T = x.shape
    K = kernel_size
    assert T >= K, "signal shorter than analysis window"
    n_frames = (T - K) // stride + 1

    # --- parameters (plain JAX, one-time) -----------------------------------
    basis_real, basis_imag = make_fourier_basis(
        n_basis, K, window_fn=window_fn,
        trainable_phase=trainable_phase, onesided=onesided)
    n_bins = basis_real.shape[0]
    basis = jnp.concatenate([basis_real, basis_imag], axis=0)  # (2*n_bins, K)

    # --- padding / tiling geometry ------------------------------------------
    R = _ceil_div(K, stride)                 # taps per frame
    Kp = R * stride
    NB = 2 * n_bins
    NB_p = _round_up(NB, 8)                  # sublane-pad fused bin axis

    TF = max(128, (frame_tile // 128) * 128)            # lane-dense frame tile
    TF = min(TF, _round_up(n_frames, 128))
    n_ft = _ceil_div(n_frames, TF)
    n_frames_p = n_ft * TF
    n_rows_p = n_frames_p + R - 1
    T_p = n_rows_p * stride

    # Fused basis, zero-padded to (NB_p, Kp), split into R stride-wide taps.
    basis_p = jnp.zeros((NB_p, Kp), jnp.float32).at[:NB, :K].set(basis)
    basis_taps = jnp.transpose(basis_p.reshape(NB_p, R, stride), (1, 0, 2))
    basis_taps = basis_taps.astype(compute_dtype)        # (R, NB_p, stride)

    # Signal -> stride-wide rows (no frame materialization, no transpose).
    x2d = x[:, 0, :]
    Tc = min(T, T_p)                                      # T_p always covers all
    x_pad = jnp.zeros((B, T_p), jnp.float32).at[:, :Tc].set(x2d[:, :Tc])
    x_rows = x_pad.reshape(B, n_rows_p, stride).astype(compute_dtype)

    # --- pallas call ----------------------------------------------------------
    kernel = functools.partial(_fourier_stft_kernel, frame_tile=TF, n_taps=R)

    out_full = pl.pallas_call(
        kernel,
        out_shape=jax.ShapeDtypeStruct((B, NB_p, n_frames_p), jnp.float32),
        grid=(B, n_ft),
        in_specs=[
            # full signal row per batch: resident across all frame tiles
            pl.BlockSpec((1, n_rows_p, stride), lambda b, j: (b, 0, 0)),
            # small fused basis: resident for the whole grid
            pl.BlockSpec((R, NB_p, stride), lambda b, j: (0, 0, 0)),
        ],
        out_specs=pl.BlockSpec((1, NB_p, TF), lambda b, j: (b, 0, j)),
        compiler_params=pltpu.CompilerParams(
            dimension_semantics=("parallel", "arbitrary")),
    )(x_rows, basis_taps)

    # crop padding; layout is already [real bins ; imag bins] x frames
    out_ri = out_full[:, :NB, :n_frames]                  # (B, 2*n_bins, n_frames)

    if return_complex:
        return lax.complex(out_ri[:, :n_bins, :], out_ri[:, n_bins:, :])
    else:
        return out_ri


# ----------------------------------------------------------------------------
if __name__ == "__main__":
    # small, deterministic example consistent with forward(): input (B, 1, T)
    n_basis = 16
    kernel_size = 16
    stride = 8
    B = 2
    n_frames = 8
    T = stride * (n_frames - 1) + kernel_size            # 72

    key = jax.random.PRNGKey(0)
    x = jax.random.normal(key, (B, 1, T), dtype=jnp.float32)

    # reference in plain JAX (framing + einsum == conv1d with stride)
    basis_real, basis_imag = make_fourier_basis(n_basis, kernel_size)
    idx = stride * jnp.arange(n_frames)[:, None] + jnp.arange(kernel_size)[None, :]
    frames = x[:, 0, :][:, idx]                           # (B, n_frames, K)
    ref_real = jnp.einsum("bfk,ok->bof", frames, basis_real)
    ref_imag = jnp.einsum("bfk,ok->bof", frames, basis_imag)

    # f32 path: tight semantic check
    out = fourier_encoder_forward(
        x, n_basis=n_basis, kernel_size=kernel_size, stride=stride,
        window_fn="hann", onesided=True, return_complex=True,
        compute_dtype=jnp.float32)
    out = jax.block_until_ready(out)
    assert out.shape == (B, n_basis // 2 + 1, n_frames), out.shape
    assert jnp.allclose(out.real, ref_real, atol=1e-3, rtol=1e-3)
    assert jnp.allclose(out.imag, ref_imag, atol=1e-3, rtol=1e-3)

    # bf16 MXU path (default fast path): looser tolerance, real-then-imag layout
    out_bf16 = fourier_encoder_forward(
        x, n_basis=n_basis, kernel_size=kernel_size, stride=stride,
        window_fn="hann", onesided=True, return_complex=False,
        compute_dtype=jnp.bfloat16)
    out_bf16 = jax.block_until_ready(out_bf16)
    ref_ri = jnp.concatenate([ref_real, ref_imag], axis=1)
    assert out_bf16.shape == (B, 2 * (n_basis // 2 + 1), n_frames), out_bf16.shape
    assert jnp.allclose(out_bf16, ref_ri, atol=1e-1, rtol=1e-1)

    print("KERNEL_OK")
</pallas_src>

<mosaic_0001>
module attributes {stable_mosaic.version = 11 : i64} {
  func.func @_fourier_stft_kernel(%arg0: i32, %arg1: i32, %arg2: memref<1x129x8xf32, #tpu.memory_space<vmem>>, %arg3: memref<2x24x8xf32, #tpu.memory_space<vmem>>, %arg4: memref<1x24x128xf32, #tpu.memory_space<vmem>>) attributes {dimension_semantics = [#tpu.dimension_semantics<parallel>, #tpu.dimension_semantics<arbitrary>], iteration_bounds = array<i64: 2, 1>, scalar_prefetch = 0 : i64, scratch_operands = 0 : i64, tpu.core_type = #tpu.core_type<tc>, window_params = [{transform_indices = @transform_0, window_bounds = array<i64: 1, 129, 8>}, {pipeline_mode = #tpu.pipeline_mode<synchronous>, transform_indices = @transform_1, window_bounds = array<i64: 2, 24, 8>}, {transform_indices = @transform_2, window_bounds = array<i64: 1, 24, 128>}]} {
    %c128_i32 = arith.constant 128 : i32
    %0 = arith.muli %arg1, %c128_i32 : i32
    %1 = tpu.assume_multiple %0, 128 : i32
    %c0_i32 = arith.constant 0 : i32
    %2 = arith.addi %1, %c0_i32 : i32
    %c0 = arith.constant 0 : index
    %3 = arith.index_cast %2 : i32 to index
    %c0_0 = arith.constant 0 : index
    %4 = vector.load %arg2[%c0, %3, %c0_0] : memref<1x129x8xf32, #tpu.memory_space<vmem>>, vector<1x128x8xf32>
    %5 = vector.shape_cast %4 : vector<1x128x8xf32> to vector<128x8xf32>
    %c0_1 = arith.constant 0 : index
    %c0_2 = arith.constant 0 : index
    %c0_3 = arith.constant 0 : index
    %6 = vector.load %arg3[%c0_1, %c0_2, %c0_3] : memref<2x24x8xf32, #tpu.memory_space<vmem>>, vector<1x24x8xf32>
    %7 = vector.shape_cast %6 : vector<1x24x8xf32> to vector<24x8xf32>
    %cst = arith.constant dense<0.000000e+00> : vector<24x128xf32>
    %8 = tpu.matmul %7, %5, %cst {dimension_numbers = #tpu.dot_dimension_numbers<[1], [1], [0], [0], [0, 0, 1, 0], [], []>} : vector<24x8xf32>, vector<128x8xf32>, vector<24x128xf32> -> vector<24x128xf32>
    %c1_i32 = arith.constant 1 : i32
    %9 = arith.addi %1, %c1_i32 : i32
    %c0_4 = arith.constant 0 : index
    %10 = arith.index_cast %9 : i32 to index
    %c0_5 = arith.constant 0 : index
    %11 = vector.load %arg2[%c0_4, %10, %c0_5] : memref<1x129x8xf32, #tpu.memory_space<vmem>>, vector<1x128x8xf32>
    %12 = vector.shape_cast %11 : vector<1x128x8xf32> to vector<128x8xf32>
    %c1 = arith.constant 1 : index
    %c0_6 = arith.constant 0 : index
    %c0_7 = arith.constant 0 : index
    %13 = vector.load %arg3[%c1, %c0_6, %c0_7] : memref<2x24x8xf32, #tpu.memory_space<vmem>>, vector<1x24x8xf32>
    %14 = vector.shape_cast %13 : vector<1x24x8xf32> to vector<24x8xf32>
    %cst_8 = arith.constant dense<0.000000e+00> : vector<24x128xf32>
    %15 = tpu.matmul %14, %12, %cst_8 {dimension_numbers = #tpu.dot_dimension_numbers<[1], [1], [0], [0], [0, 0, 1, 0], [], []>} : vector<24x8xf32>, vector<128x8xf32>, vector<24x128xf32> -> vector<24x128xf32>
    %16 = arith.addf %8, %15 : vector<24x128xf32>
    %c0_9 = arith.constant 0 : index
    %c0_10 = arith.constant 0 : index
    %c0_11 = arith.constant 0 : index
    %17 = vector.load %arg4[%c0_9, %c0_10, %c0_11] : memref<1x24x128xf32, #tpu.memory_space<vmem>>, vector<1x24x128xf32>
    %18 = vector.shape_cast %17 : vector<1x24x128xf32> to vector<24x128xf32>
    %19 = vector.shape_cast %16 : vector<24x128xf32> to vector<1x24x128xf32>
    tpu.vector_store %arg4[%c0_9, %c0_10, %c0_11], %19 {strides = array<i32>} : memref<1x24x128xf32, #tpu.memory_space<vmem>>, vector<1x24x128xf32>,
    return
  }
  func.func @transform_0(%arg0: i32, %arg1: i32) -> (i32, i32, i32) {
    %c0_i32 = arith.constant 0 : i32
    %c0_i32_0 = arith.constant 0 : i32
    %c0_i32_1 = arith.constant 0 : i32
    return %arg0, %c0_i32, %c0_i32_0 : i32, i32, i32
  }
  func.func @transform_1(%arg0: i32, %arg1: i32) -> (i32, i32, i32) {
    %c0_i32 = arith.constant 0 : i32
    %c0_i32_0 = arith.constant 0 : i32
    %c0_i32_1 = arith.constant 0 : i32
    %c0_i32_2 = arith.constant 0 : i32
    return %c0_i32, %c0_i32_0, %c0_i32_1 : i32, i32, i32
  }
  func.func @transform_2(%arg0: i32, %arg1: i32) -> (i32, i32, i32) {
    %c0_i32 = arith.constant 0 : i32
    %c0_i32_0 = arith.constant 0 : i32
    return %arg0, %c0_i32, %arg1 : i32, i32, i32
  }
}

</mosaic_0001>

<llo_original>
// kernel: tpu_custom_call.1
$region0: #{tpu_custom_call.1}
  #allocation0 [shape = 'u32[]', space=smem, size = 0x4, offset = 0x4, fixed_abs, tag = 'smem constant byte address 0x4 - core index']
  #allocation1 [shape = 'u32[144,128]{1,0:T(1,128)}', space=vmem, size = 0x12000, scoped, tag = 'internal scratch']
  %s0 = inlined_call_operand.vmem [shape: f32[2,129,8], index: 0, kind: input, shape index: {}]
  %s1 = inlined_call_operand.vmem [shape: f32[2,24,8], index: 1, kind: input, shape index: {}]
  %s2 = inlined_call_operand.hbm [shape: f32[2,24,128], index: 2, kind: output, shape index: {}]
  %s3 = sld [smem:[#allocation0]]
  $region41: #{tpu_custom_call.1} parent=0
    _
  %s5 = ssub.s32 1, %s3
  %s6 = scalar_select 0, %s5, %s3
  $region1: #{tpu_custom_call.1} parent=0
    #allocation2 [shape = 'u8[24576]{0}', space=vmem, size = 0x6000, scoped, tag = 'output window, operand 0']
    #allocation3 [shape = 's32[2]{0}', space=sflag, size = 0x8, scoped, tag = 'scoped memory for tpu_custom_call.1']
    %7 = vsyncpa [#allocation3], 0
    %s8 = scalar_lea.sflag [#allocation3], 1
    %9 = vsyncpa %s8, 0
    loop: start=0, step=1, limit=4
    $region2: #{tpu_custom_call.1} parent=1 // loop_pre_header
      _
    $region3: #{tpu_custom_call.1} parent=1 // loop_header
      %s11 = sphi 0, %s15
      %p12 = scmp.ge.s32.totalorder %s11, 4
      %s18 = sphi 0, %s30
      %s19 = sphi 0, %s26
      %s20 = sphi 0, %s18
      %s21 = sphi 0, %s19
      %s22 = sphi 0, %s20
      %s23 = sphi 0, %s21
      %s33 = sphi 0, %s35
      %s36 = sphi 0, %s33
      %s37 = sphi 0, %s36
      %s53 = sphi 0, %s37
      %s57 = sphi 0, %s57
      %s59 = sphi 0, %s57
      %s60 = sphi 0, %s59
      %s74 = sphi 0, %s60
      %s82 = sphi 0, %s84
      %s85 = sphi 0, %s82
      %s86 = sphi 0, %s85
      %s102 = sphi 0, %s86
    $region4: #{tpu_custom_call.1} parent=1 // loop_header_branch
      %14 = sbr.rel (%p12) target = $region8
    $region5: #{tpu_custom_call.1} parent=1 // loop_body
      %s16 = ssub.s32 %s11, 1
      %s17 = ssub.s32 %s11, 2
      %s24 = sadd.s32 1, %s19
      %p25 = scmp.ge.s32.totalorder %s24, 1
      %s26 = scalar_select %p25, 0, %s24
      %s27 = sadd.s32 1, %s18
      %s28 = scalar_select %p25, %s27, %s18
      %p29 = scmp.ge.s32.totalorder %s28, 2
      %s30 = scalar_select %p29, 0, %s28
      %s31 = ssub.s32 %s18, %s30
      %p32 = scmp.eq.s32.totalorder %s31, 0
      %s34 = sadd.s32 %s33, 1
      %s35 = scalar_select %p32, %s33, %s34
      %p38 = pneg %p32
      %p39 = scmp.eq.s32.totalorder %s11, 1
      %p40 = por %p38, %p39
      %p41 = scmp.ne.s32.totalorder %s33, %s36
      %p42 = scmp.eq.s32.totalorder %s11, 0
      %p43 = por %p41, %p42
      %p44 = scmp.ne.s32.totalorder %s33, %s36
      %p45 = scmp.eq.s32.totalorder %s16, 1
      %p46 = por %p44, %p45
      %p47 = scmp.ne.s32.totalorder %s36, %s37
      %p48 = scmp.eq.s32.totalorder %s16, 0
      %p49 = por %p47, %p48
      %p50 = scmp.ne.s32.totalorder %s36, %s37
      %p51 = scmp.eq.s32.totalorder %s17, 1
      %p52 = por %p50, %p51
      %p54 = scmp.ne.s32.totalorder %s37, %s53
      %p55 = scmp.eq.s32.totalorder %s17, 0
      %p56 = por %p54, %p55
      %s58 = sadd.s32 %s57, 1
      %p61 = scmp.eq.s32.totalorder %s11, 1
      %p62 = scmp.ne.s32.totalorder %s57, %s59
      %p63 = scmp.eq.s32.totalorder %s11, 0
      %p64 = por %p62, %p63
      %p65 = scmp.ne.s32.totalorder %s57, %s59
      %p66 = scmp.eq.s32.totalorder %s16, 1
      %p67 = por %p65, %p66
      %p68 = scmp.ne.s32.totalorder %s59, %s60
      %p69 = scmp.eq.s32.totalorder %s16, 0
      %p70 = por %p68, %p69
      %p71 = scmp.ne.s32.totalorder %s59, %s60
      %p72 = scmp.eq.s32.totalorder %s17, 1
      %p73 = por %p71, %p72
      %p75 = scmp.ne.s32.totalorder %s60, %s74
      %p76 = scmp.eq.s32.totalorder %s17, 0
      %p77 = por %p75, %p76
      %s78 = ssub.s32 %s18, %s30
      %s79 = ssub.s32 %s19, %s26
      %s80 = sor.u32 %s78, %s79
      %p81 = scmp.eq.s32.totalorder %s80, 0
      %s83 = sadd.s32 %s82, 1
      %s84 = scalar_select %p81, %s82, %s83
      %p87 = pneg %p81
      %p88 = scmp.eq.s32.totalorder %s11, 1
      %p89 = por %p87, %p88
      %p90 = scmp.ne.s32.totalorder %s82, %s85
      %p91 = scmp.eq.s32.totalorder %s11, 0
      %p92 = por %p90, %p91
      %p93 = scmp.ne.s32.totalorder %s82, %s85
      %p94 = scmp.eq.s32.totalorder %s16, 1
      %p95 = por %p93, %p94
      %p96 = scmp.ne.s32.totalorder %s85, %s86
      %p97 = scmp.eq.s32.totalorder %s16, 0
      %p98 = por %p96, %p97
      %p99 = scmp.ne.s32.totalorder %s85, %s86
      %p100 = scmp.eq.s32.totalorder %s17, 1
      %p101 = por %p99, %p100
      %p103 = scmp.ne.s32.totalorder %s86, %s102
      %p104 = scmp.eq.s32.totalorder %s17, 0
      %p105 = por %p103, %p104
      %p106 = scmp.le.s32.totalorder 1, %s11
      %p107 = scmp.lt.s32.totalorder %s11, 3
      %p108 = pnand %p106, %p107
      %p109 = pneg %p108
      // Predicated region
      $region9: #{tpu_custom_call.1} parent=5 // pred_check
        _
      $region10: #{tpu_custom_call.1} parent=5 // pred_check_branch
        %111 = sbr.rel (%p108) target = $region12
      $region11: #{tpu_custom_call.1} parent=5 // pred_region
        %s112 = ssub.s32 %s11, 1
        // Predicated region
        $region13: #{tpu_custom_call.1} parent=11 // pred_check
          %p113 = pneg %p70
        $region14: #{tpu_custom_call.1} parent=11 // pred_check_branch
          %115 = sbr.rel (%p113) target = $region16
        $region15: #{tpu_custom_call.1} parent=11 // pred_region
          _
        $region16: #{tpu_custom_call.1} parent=11 // pred_fallthru
          _
      $region12: #{tpu_custom_call.1} parent=5 // pred_fallthru
        _
      %p116 = scmp.lt.s32.totalorder %s11, 2
      // Predicated region
      $region17: #{tpu_custom_call.1} parent=5 // pred_check
        %p117 = pneg %p116
      $region18: #{tpu_custom_call.1} parent=5 // pred_check_branch
        %119 = sbr.rel (%p117) target = $region20
      $region19: #{tpu_custom_call.1} parent=5 // pred_region
        // Predicated region
        $region21: #{tpu_custom_call.1} parent=19 // pred_check
          %p120 = pneg %p43
        $region22: #{tpu_custom_call.1} parent=19 // pred_check_branch
          %122 = sbr.rel (%p120) target = $region24
        $region23: #{tpu_custom_call.1} parent=19 // pred_region
          %p123 = scmp.lt.s32.totalorder %s18, 1
          %s124 = scalar_select %p123, %s18, 1
          %s125 = smul.addr %s124, 17
          %s126 = smul.addr %s125, 8
          %s127 = scalar_lea.vmem %s0, %s126
        $region24: #{tpu_custom_call.1} parent=19 // pred_fallthru
          _
      $region20: #{tpu_custom_call.1} parent=5 // pred_fallthru
        _
      %p128 = scmp.le.s32.totalorder 1, %s11
      %p129 = scmp.lt.s32.totalorder %s11, 3
      %p130 = pnand %p128, %p129
      %p131 = pneg %p130
      // Predicated region
      $region25: #{tpu_custom_call.1} parent=5 // pred_check
        _
      $region26: #{tpu_custom_call.1} parent=5 // pred_check_branch
        %133 = sbr.rel (%p130) target = $region28
      $region27: #{tpu_custom_call.1} parent=5 // pred_region
        %s134 = ssub.s32 %s11, 1
        %p135 = scmp.lt.s32.totalorder %s20, 1
        %s136 = scalar_select %p135, %s20, 1
        %s137 = smul.addr %s136, 17
        %s138 = smul.addr %s137, 8
        %s139 = scalar_lea.vmem %s0, %s138
        %p140 = pneg %p49
        %p141 = pneg %p46
        %p142 = pneg %p70
        %p143 = pneg %p67
        %p144 = pneg %p98
        %p145 = pneg %p95
        %s146 = sand.u32 %s85, 1
        %s147 = scalar_lea.sflag [#allocation3], %s146
        %s148 = sand.u32 %s85, 1
        %s149 = smul.addr %s148, 24
        %s150 = scalar_lea.vmem [#allocation2], %s149
        %p151 = scmp.lt.s32.totalorder %s20, 1
        %s152 = scalar_select %p151, %s20, 1
        %s153 = smul.addr %s152, 17
        %s154 = smul.addr %s153, 8
        %s155 = scalar_lea.vmem %s0, %s154
        %s156 = smul.u32 %s21, 128
        %s157 = scalar_lea.vmem %s155, %s156
        %v158 = vld [vmem:[%s157] sm:$0xff]
        %v159 = vld [vmem:[%s157 + $0x8] sm:$0xff]
        %v160 = vld [vmem:[%s157 + $0x10] sm:$0xff]
        %v161 = vld [vmem:[%s157 + $0x18] sm:$0xff]
        %v162 = vld [vmem:[%s157 + $0x20] sm:$0xff]
        %v163 = vld [vmem:[%s157 + $0x28] sm:$0xff]
        %v164 = vld [vmem:[%s157 + $0x30] sm:$0xff]
        %v165 = vld [vmem:[%s157 + $0x38] sm:$0xff]
        %v166 = vld [vmem:[%s157 + $0x40] sm:$0xff]
        %v167 = vld [vmem:[%s157 + $0x48] sm:$0xff]
        %v168 = vld [vmem:[%s157 + $0x50] sm:$0xff]
        %v169 = vld [vmem:[%s157 + $0x58] sm:$0xff]
        %v170 = vld [vmem:[%s157 + $0x60] sm:$0xff]
        %v171 = vld [vmem:[%s157 + $0x68] sm:$0xff]
        %v172 = vld [vmem:[%s157 + $0x70] sm:$0xff]
        %v173 = vld [vmem:[%s157 + $0x78] sm:$0xff]
        %v174 = vld [vmem:[%s1] sm:$0xff]
        %v175 = vld [vmem:[%s1 + $0x8] sm:$0xff]
        %v176 = vld [vmem:[%s1 + $0x10] sm:$0xff]
        %s177 = sadd.s32 %s156, 1
        %s178 = scalar_lea.vmem %s155, %s177
        %v179 = vld [vmem:[%s178] sm:$0xff]
        %v180 = vld [vmem:[%s178 + $0x8] sm:$0xff]
        %v181 = vld [vmem:[%s178 + $0x10] sm:$0xff]
        %v182 = vld [vmem:[%s178 + $0x18] sm:$0xff]
        %v183 = vld [vmem:[%s178 + $0x20] sm:$0xff]
        %v184 = vld [vmem:[%s178 + $0x28] sm:$0xff]
        %v185 = vld [vmem:[%s178 + $0x30] sm:$0xff]
        %v186 = vld [vmem:[%s178 + $0x38] sm:$0xff]
        %v187 = vld [vmem:[%s178 + $0x40] sm:$0xff]
        %v188 = vld [vmem:[%s178 + $0x48] sm:$0xff]
        %v189 = vld [vmem:[%s178 + $0x50] sm:$0xff]
        %v190 = vld [vmem:[%s178 + $0x58] sm:$0xff]
        %v191 = vld [vmem:[%s178 + $0x60] sm:$0xff]
        %v192 = vld [vmem:[%s178 + $0x68] sm:$0xff]
        %v193 = vld [vmem:[%s178 + $0x70] sm:$0xff]
        %v194 = vld [vmem:[%s178 + $0x78] sm:$0xff]
        %s195 = scalar_lea.vmem %s1, 24
        %v196 = vld [vmem:[%s195] sm:$0xff]
        %v197 = vld [vmem:[%s195 + $0x8] sm:$0xff]
        %v198 = vld [vmem:[%s195 + $0x10] sm:$0xff]
        %vm199 = vcmask 64512
        %v201 = vsel %vm199, %v196, 0
        %v204 = vsel %vm199, %v197, 0
        %v207 = vsel %vm199, %v198, 0
        %v210 = vsel %vm199, %v179, 0
        %v213 = vsel %vm199, %v180, 0
        %v216 = vsel %vm199, %v181, 0
        %v219 = vsel %vm199, %v182, 0
        %v222 = vsel %vm199, %v183, 0
        %v225 = vsel %vm199, %v184, 0
        %v228 = vsel %vm199, %v185, 0
        %v231 = vsel %vm199, %v186, 0
        %v234 = vsel %vm199, %v187, 0
        %v237 = vsel %vm199, %v188, 0
        %v240 = vsel %vm199, %v189, 0
        %v243 = vsel %vm199, %v190, 0
        %v246 = vsel %vm199, %v191, 0
        %v249 = vsel %vm199, %v192, 0
        %v252 = vsel %vm199, %v193, 0
        %v255 = vsel %vm199, %v194, 0
        %257 = vmatprep.subr.mxu0 0.0
        %258 = vmatpush1.xpose.msra.mxu0 %v210
        %259 = vmatprep.subr.mxu0 0.0
        %260 = vmatpush1.xpose.msra.mxu0 %v213
        %261 = vmatprep.subr.mxu0 0.0
        %262 = vmatpush1.xpose.msra.mxu0 %v216
        %263 = vmatprep.subr.mxu0 0.0
        %264 = vmatpush1.xpose.msra.mxu0 %v219
        %265 = vmatprep.subr.mxu0 0.0
        %266 = vmatpush1.xpose.msra.mxu0 %v222
        %267 = vmatprep.subr.mxu0 0.0
        %268 = vmatpush1.xpose.msra.mxu0 %v225
        %269 = vmatprep.subr.mxu0 0.0
        %270 = vmatpush1.xpose.msra.mxu0 %v228
        %271 = vmatprep.subr.mxu0 0.0
        %272 = vmatpush1.xpose.msra.mxu0 %v231
        %273 = vmatprep.subr.mxu0 0.0
        %274 = vmatpush1.xpose.msra.mxu0 %v234
        %275 = vmatprep.subr.mxu0 0.0
        %276 = vmatpush1.xpose.msra.mxu0 %v237
        %277 = vmatprep.subr.mxu0 0.0
        %278 = vmatpush1.xpose.msra.mxu0 %v240
        %279 = vmatprep.subr.mxu0 0.0
        %280 = vmatpush1.xpose.msra.mxu0 %v243
        %281 = vmatprep.subr.mxu0 0.0
        %282 = vmatpush1.xpose.msra.mxu0 %v246
        %283 = vmatprep.subr.mxu0 0.0
        %284 = vmatpush1.xpose.msra.mxu0 %v249
        %285 = vmatprep.subr.mxu0 0.0
        %286 = vmatpush1.xpose.msra.mxu0 %v252
        %287 = vmatprep.subr.mxu0 0.0
        %288 = vmatpush1.xpose.msra.mxu0 %v255
        %289 = vmatprep.subr.mxu0 0.0
        %290 = vmatpush1.xpose.msra.mxu0 0.0
        %291 = vmatprep.subr.mxu0 0.0
        %292 = vmatpush1.xpose.msra.mxu0 0.0
        %293 = vmatprep.subr.mxu0 0.0
        %294 = vmatpush1.xpose.msra.mxu0 0.0
        %295 = vmatprep.subr.mxu0 0.0
        %296 = vmatpush1.xpose.msra.mxu0 0.0
        %297 = vmatprep.subr.mxu0 0.0
        %298 = vmatpush1.xpose.msra.mxu0 0.0
        %299 = vmatprep.subr.mxu0 0.0
        %300 = vmatpush1.xpose.msra.mxu0 0.0
        %301 = vmatprep.subr.mxu0 0.0
        %302 = vmatpush1.xpose.msra.mxu0 0.0
        %303 = vmatprep.subr.mxu0 0.0
        %304 = vmatpush1.xpose.msra.mxu0 0.0
        %305 = vmatprep.subr.mxu0 0.0
        %306 = vmatpush1.xpose.msra.mxu0 0.0
        %307 = vmatprep.subr.mxu0 0.0
        %308 = vmatpush1.xpose.msra.mxu0 0.0
        %309 = vmatprep.subr.mxu0 0.0
        %310 = vmatpush1.xpose.msra.mxu0 0.0
        %311 = vmatprep.subr.mxu0 0.0
        %312 = vmatpush1.xpose.msra.mxu0 0.0
        %313 = vmatprep.subr.mxu0 0.0
        %314 = vmatpush1.xpose.msra.mxu0 0.0
        %315 = vmatprep.subr.mxu0 0.0
        %316 = vmatpush1.xpose.msra.mxu0 0.0
        %317 = vmatprep.subr.mxu0 0.0
        %318 = vmatpush1.xpose.msra.mxu0 0.0
        %319 = vmatprep.subr.mxu0 0.0
        %320 = vmatpush1.xpose.msra.mxu0 0.0
        %321 = vmatprep.mubr.f32.mxu0 0.0
        %322 = vmatmul.mubr.f32.gmra.mrb[0].mxu0 %v201
        %v323 = vpop.f32.mrb[0].mxu0
        %v324 = vadd.f32 0.0, %v323
        %v325 = vpop.f32.mrb[0].mxu0
        %326 = vmatprep.mubr.f32.mxu0 0.0
        %327 = vmatmul.mubr.f32.gmra.mrb[0].mxu0 %v204
        %v328 = vpop.f32.mrb[0].mxu0
        %v329 = vadd.f32 0.0, %v328
        %v330 = vpop.f32.mrb[0].mxu0
        %331 = vmatprep.mubr.f32.mxu0 0.0
        %332 = vmatmul.mubr.f32.gmra.mrb[0].mxu0 %v207
        %v333 = vpop.f32.mrb[0].mxu0
        %v334 = vadd.f32 0.0, %v333
        %v335 = vpop.f32.mrb[0].mxu0
        %336 = vdwg.mxu0
        %v338 = vsel %vm199, %v174, 0
        %v341 = vsel %vm199, %v175, 0
        %v344 = vsel %vm199, %v176, 0
        %v347 = vsel %vm199, %v158, 0
        %v350 = vsel %vm199, %v159, 0
        %v353 = vsel %vm199, %v160, 0
        %v356 = vsel %vm199, %v161, 0
        %v359 = vsel %vm199, %v162, 0
        %v362 = vsel %vm199, %v163, 0
        %v365 = vsel %vm199, %v164, 0
        %v368 = vsel %vm199, %v165, 0
        %v371 = vsel %vm199, %v166, 0
        %v374 = vsel %vm199, %v167, 0
        %v377 = vsel %vm199, %v168, 0
        %v380 = vsel %vm199, %v169, 0
        %v383 = vsel %vm199, %v170, 0
        %v386 = vsel %vm199, %v171, 0
        %v389 = vsel %vm199, %v172, 0
        %v392 = vsel %vm199, %v173, 0
        %394 = vmatprep.subr.mxu0 0.0
        %395 = vmatpush1.xpose.msra.mxu0 %v347
        %396 = vmatprep.subr.mxu0 0.0
        %397 = vmatpush1.xpose.msra.mxu0 %v350
        %398 = vmatprep.subr.mxu0 0.0
        %399 = vmatpush1.xpose.msra.mxu0 %v353
        %400 = vmatprep.subr.mxu0 0.0
        %401 = vmatpush1.xpose.msra.mxu0 %v356
        %402 = vmatprep.subr.mxu0 0.0
        %403 = vmatpush1.xpose.msra.mxu0 %v359
        %404 = vmatprep.subr.mxu0 0.0
        %405 = vmatpush1.xpose.msra.mxu0 %v362
        %406 = vmatprep.subr.mxu0 0.0
        %407 = vmatpush1.xpose.msra.mxu0 %v365
        %408 = vmatprep.subr.mxu0 0.0
        %409 = vmatpush1.xpose.msra.mxu0 %v368
        %410 = vmatprep.subr.mxu0 0.0
        %411 = vmatpush1.xpose.msra.mxu0 %v371
        %412 = vmatprep.subr.mxu0 0.0
        %413 = vmatpush1.xpose.msra.mxu0 %v374
        %414 = vmatprep.subr.mxu0 0.0
        %415 = vmatpush1.xpose.msra.mxu0 %v377
        %416 = vmatprep.subr.mxu0 0.0
        %417 = vmatpush1.xpose.msra.mxu0 %v380
        %418 = vmatprep.subr.mxu0 0.0
        %419 = vmatpush1.xpose.msra.mxu0 %v383
        %420 = vmatprep.subr.mxu0 0.0
        %421 = vmatpush1.xpose.msra.mxu0 %v386
        %422 = vmatprep.subr.mxu0 0.0
        %423 = vmatpush1.xpose.msra.mxu0 %v389
        %424 = vmatprep.subr.mxu0 0.0
        %425 = vmatpush1.xpose.msra.mxu0 %v392
        %426 = vmatprep.subr.mxu0 0.0
        %427 = vmatpush1.xpose.msra.mxu0 0.0
        %428 = vmatprep.subr.mxu0 0.0
        %429 = vmatpush1.xpose.msra.mxu0 0.0
        %430 = vmatprep.subr.mxu0 0.0
        %431 = vmatpush1.xpose.msra.mxu0 0.0
        %432 = vmatprep.subr.mxu0 0.0
        %433 = vmatpush1.xpose.msra.mxu0 0.0
        %434 = vmatprep.subr.mxu0 0.0
        %435 = vmatpush1.xpose.msra.mxu0 0.0
        %436 = vmatprep.subr.mxu0 0.0
        %437 = vmatpush1.xpose.msra.mxu0 0.0
        %438 = vmatprep.subr.mxu0 0.0
        %439 = vmatpush1.xpose.msra.mxu0 0.0
        %440 = vmatprep.subr.mxu0 0.0
        %441 = vmatpush1.xpose.msra.mxu0 0.0
        %442 = vmatprep.subr.mxu0 0.0
        %443 = vmatpush1.xpose.msra.mxu0 0.0
        %444 = vmatprep.subr.mxu0 0.0
        %445 = vmatpush1.xpose.msra.mxu0 0.0
        %446 = vmatprep.subr.mxu0 0.0
        %447 = vmatpush1.xpose.msra.mxu0 0.0
        %448 = vmatprep.subr.mxu0 0.0
        %449 = vmatpush1.xpose.msra.mxu0 0.0
        %450 = vmatprep.subr.mxu0 0.0
        %451 = vmatpush1.xpose.msra.mxu0 0.0
        %452 = vmatprep.subr.mxu0 0.0
        %453 = vmatpush1.xpose.msra.mxu0 0.0
        %454 = vmatprep.subr.mxu0 0.0
        %455 = vmatpush1.xpose.msra.mxu0 0.0
        %456 = vmatprep.subr.mxu0 0.0
        %457 = vmatpush1.xpose.msra.mxu0 0.0
        %458 = vmatprep.mubr.f32.mxu0 0.0
        %459 = vmatmul.mubr.f32.gmra.mrb[0].mxu0 %v338
        %v460 = vpop.f32.mrb[0].mxu0
        %v461 = vadd.f32 %v324, %v460
        %v462 = vpop.f32.mrb[0].mxu0
        %463 = vmatprep.mubr.f32.mxu0 0.0
        %464 = vmatmul.mubr.f32.gmra.mrb[0].mxu0 %v341
        %v465 = vpop.f32.mrb[0].mxu0
        %v466 = vadd.f32 %v329, %v465
        %v467 = vpop.f32.mrb[0].mxu0
        %468 = vmatprep.mubr.f32.mxu0 0.0
        %469 = vmatmul.mubr.f32.gmra.mrb[0].mxu0 %v344
        %v470 = vpop.f32.mrb[0].mxu0
        %v471 = vadd.f32 %v334, %v470
        %v472 = vpop.f32.mrb[0].mxu0
        %473 = vdwg.mxu0
        %474 = vst [vmem:[%s150] sm:$0xff] %v461
        %475 = vst [vmem:[%s150 + $0x8] sm:$0xff] %v466
        %476 = vst [vmem:[%s150 + $0x10] sm:$0xff] %v471
        %s477 = sand.u32 %s85, 1
        %s478 = scalar_lea.sflag [#allocation3], %s477
        %s479 = sand.u32 %s85, 1
        %s480 = smul.addr %s479, 24
        %s481 = scalar_lea.vmem [#allocation2], %s480
        // Predicated region
        $region29: #{tpu_custom_call.1} parent=27 // pred_check
          %p482 = pneg %p95
        $region30: #{tpu_custom_call.1} parent=27 // pred_check_branch
          %484 = sbr.rel (%p482) target = $region32
        $region31: #{tpu_custom_call.1} parent=27 // pred_region
          %s486 = ssub.s32 384, 384
          %487 = vsyncadd %s478, %s486
          %s488 = smul.addr %s20, 3
          %s489 = sadd.s32 %s21, %s488
          %s490 = smul.addr %s489, 128
          %s491 = scalar_lea.hbm %s2, %s490
          %s492 = sshll.u32 %s481, 4
          %s493 = int_to_ptr.vmem [resolvable:$true] %s492
          %498 = dma.vmem_to_hbm [thread:$0]  %s493, 384, %s491, %s478, 128, 128, 8
        $region32: #{tpu_custom_call.1} parent=27 // pred_fallthru
          _
      $region28: #{tpu_custom_call.1} parent=5 // pred_fallthru
        _
      %p499 = scmp.le.s32.totalorder 2, %s11
      // Predicated region
      $region33: #{tpu_custom_call.1} parent=5 // pred_check
        %p500 = pneg %p499
      $region34: #{tpu_custom_call.1} parent=5 // pred_check_branch
        %502 = sbr.rel (%p500) target = $region36
      $region35: #{tpu_custom_call.1} parent=5 // pred_region
        %s503 = ssub.s32 %s11, 2
        // Predicated region
        $region37: #{tpu_custom_call.1} parent=35 // pred_check
          %p504 = pneg %p101
        $region38: #{tpu_custom_call.1} parent=35 // pred_check_branch
          %506 = sbr.rel (%p504) target = $region40
        $region39: #{tpu_custom_call.1} parent=35 // pred_region
          %s507 = sand.u32 %s86, 1
          %s508 = scalar_lea.sflag [#allocation3], %s507
          %s509 = sand.u32 %s86, 1
          %s510 = smul.addr %s509, 24
          %s511 = scalar_lea.vmem [#allocation2], %s510
          %512 = dma.done %s508, 384
        $region40: #{tpu_custom_call.1} parent=35 // pred_fallthru
          _
      $region36: #{tpu_custom_call.1} parent=5 // pred_fallthru
        _
    $region6: #{tpu_custom_call.1} parent=1 // loop_footer
      %s15 = sadd.s32 1, %s11
    $region7: #{tpu_custom_call.1} parent=1 // loop_footer_branch
      %10 = sbr.rel target = $region3
    $region8: #{tpu_custom_call.1} parent=1 // loop_exit
      _
    %513 = vsyncpa [#allocation3], 1
    %s514 = scalar_lea.sflag [#allocation3], 1
    %515 = vsyncpa %s514, 1

</llo_original>
